<compile_context>
chip_gen: v7x
topology: tpu7x:2x2x1
jax: 0.10.0
libtpu: 0.0.40
codegen_flags: <defaults>
</compile_context>

<pallas_src>
import jax
import jax.numpy as jnp
import numpy as np
from jax.experimental import pallas as pl
from jax.experimental.pallas import tpu as pltpu


def _round_up(x, m):
    return ((x + m - 1) // m) * m


# -----------------------------------------------------------------------------
# Row-tiled Linear:  out = x @ w + b
# Used for the backbone (whole batch) and for transforming the whole embedding
# bank (T*U rows) through the learnable_attention matrix in one pass.
# -----------------------------------------------------------------------------
def linear_kernel(x_ref, w_ref, b_ref, o_ref):
    o_ref[...] = (jnp.dot(x_ref[...], w_ref[...],
                          preferred_element_type=jnp.float32)
                  + b_ref[...]).astype(o_ref.dtype)


def pallas_linear(x, w, b, tm=256):
    """x:(M,K) @ w:(K,N) + b:(1,N), tiled over M with `tm`-row blocks."""
    M, K = x.shape
    _, N = w.shape
    tm = min(tm, _round_up(M, 8))          # sublane-aligned tile, never bigger than M
    Mp = _round_up(M, tm)
    if Mp != M:                            # pad so every block is full (stores stay unmasked)
        x = jnp.pad(x, ((0, Mp - M), (0, 0)))
    # TODO(synk): for very large K/N also tile those axes (256-wide on v6e/v7x) and
    # optionally feed bf16 operands to the MXU; kept f32 + full K/N here for exactness.
    out = pl.pallas_call(
        linear_kernel,
        out_shape=jax.ShapeDtypeStruct((Mp, N), jnp.float32),
        grid_spec=pltpu.PrefetchScalarGridSpec(
            num_scalar_prefetch=0,
            grid=(Mp // tm,),
            in_specs=[
                pl.BlockSpec((tm, K), lambda i: (i, 0)),   # streamed row tile
                pl.BlockSpec((K, N), lambda i: (0, 0)),    # weights resident
                pl.BlockSpec((1, N), lambda i: (0, 0)),    # bias resident
            ],
            out_specs=pl.BlockSpec((tm, N), lambda i: (i, 0)),
        ),
        compiler_params=pltpu.CompilerParams(
            dimension_semantics=("parallel",),             # rows independent -> 2 TCs on v7x
        ),
    )(x, w, b)
    return out[:M] if Mp != M else out


# -----------------------------------------------------------------------------
# Pooling over unique timestamps.
# Grid = (G,) with G = min(B, T); step g handles timestamp uniq[g]:
#   - V slab (1, U, D) gathered via scalar-prefetched index (DMA'd once per slab)
#   - scores / weighted-sum as (B,D)x(D,U) and (B,U)x(U,D) MXU matmuls
#   - softmax + valid-user masking on the U lane axis (in-register iota mask)
#   - rows whose idx matches this timestamp are selected into the resident output.
# -----------------------------------------------------------------------------
def pooling_kernel(uniq_ref, cntg_ref,    # SMEM scalar prefetch: (G,) int32 each
                   idx_ref,               # (B, 1) int32, resident: bank index per row
                   local_ref,             # (B, D) f32, resident: backbone embeddings
                   v_ref,                 # (1, U, D) f32: this step's pre-transformed V slab
                   out_ref):              # (B, D) f32, resident accumulator
    g = pl.program_id(0)

    @pl.when(g == 0)
    def _():
        out_ref[...] = jnp.zeros_like(out_ref)

    local = local_ref[...]                                   # (B, D)
    v = v_ref[0]                                             # (U, D)
    B, _ = local.shape
    U = v.shape[0]

    # scores[b, u] = <local[b], v[u]>  -> MXU matmul with rhs contracted on D
    scores = jax.lax.dot_general(local, v, (((1,), (1,)), ((), ())),
                                 preferred_element_type=jnp.float32)   # (B, U)

    # valid-user mask on the lane axis (users are dense-packed per timestamp)
    cnt = cntg_ref[g]
    valid = jax.lax.broadcasted_iota(jnp.int32, (B, U), 1) < cnt
    scores = jnp.where(valid, scores, -1e30)

    m = jnp.max(scores, axis=-1, keepdims=True)              # softmax over users (lanes)
    e = jnp.exp(scores - m) * valid.astype(jnp.float32)
    denom = jnp.maximum(jnp.sum(e, axis=-1, keepdims=True), 1e-30)  # guard empty timestamp
    probs = e / denom                                        # (B, U)

    pooled_t = jnp.dot(probs, v, preferred_element_type=jnp.float32)  # (B, D) MXU matmul

    t = uniq_ref[g]
    row_sel = idx_ref[...] == t                              # (B, 1)
    out_ref[...] = jnp.where(row_sel, pooled_t, out_ref[...]).astype(out_ref.dtype)


def pooling_model_forward(x_feats, event_time_max, times, bank, counts,
                          wb, bb, wa, ba):
    B, _ = x_feats.shape
    T, U, D = bank.shape

    # ---- local_forward: backbone on the whole batch (row-tiled matmul) ----
    local = pallas_linear(x_feats, wb, bb)                               # (B, D)

    # ---- learnable_attention_matrix applied to every bank row once ----
    v_all = pallas_linear(bank.reshape(T * U, D), wa, ba).reshape(T, U, D)

    # ---- time -> bank index (index glue, not hot path) ----
    idx = jnp.searchsorted(times, event_time_max, side="right").astype(jnp.int32) - 1
    # TODO(synk): idx < 0 maps to a torch.rand() fallback in the reference; we clamp to 0.
    idx = jnp.maximum(idx, 0)

    # Unique used timestamps (padded with a duplicate -> idempotent extra step).
    G = min(B, T)
    uniq = jnp.unique(idx, size=G, fill_value=idx[0]).astype(jnp.int32)  # (G,)
    cnt_g = counts[uniq].astype(jnp.int32)                               # (G,)
    idx2d = idx.reshape(B, 1)

    grid_spec = pltpu.PrefetchScalarGridSpec(
        num_scalar_prefetch=2,                 # uniq, cnt_g land in SMEM
        grid=(G,),
        in_specs=[
            pl.BlockSpec((B, 1), lambda g, uniq, cnt: (0, 0)),        # idx, resident
            pl.BlockSpec((B, D), lambda g, uniq, cnt: (0, 0)),        # local, resident
            pl.BlockSpec((1, U, D), lambda g, uniq, cnt: (uniq[g], 0, 0)),  # V slab gather
        ],
        out_specs=pl.BlockSpec((B, D), lambda g, uniq, cnt: (0, 0)),  # resident accumulator
    )

    pooled = pl.pallas_call(
        pooling_kernel,
        out_shape=jax.ShapeDtypeStruct((B, D), jnp.float32),
        grid_spec=grid_spec,
        compiler_params=pltpu.CompilerParams(
            # output is resident across the timestamp axis -> reduction-style axis
            dimension_semantics=("arbitrary",),
            # VMEM need is ~2*U*D*4 (double-buffered slab) + 3*B*D*4; defaults suffice.
        ),
        # TODO(synk): for very large U add a U-chunk grid axis with an online-softmax
        # accumulator; for very large B tile the batch axis of local/out.
    )(uniq, cnt_g, idx2d, local, v_all)

    # forward(): concat(local, global) along dim=1
    return jnp.concatenate([local, pooled], axis=1)


# -----------------------------------------------------------------------------
# Pure numpy reference (mirrors PoolingModel.forward with learnable_attention)
# -----------------------------------------------------------------------------
def reference_forward(x_feats, event_time_max, times, bank, counts, wb, bb, wa, ba):
    x_feats, times, bank, counts, wb, bb, wa, ba = map(
        np.asarray, (x_feats, times, bank, counts, wb, bb, wa, ba))
    local = x_feats @ wb + bb
    idx = np.maximum(
        np.searchsorted(times, np.asarray(event_time_max), side="right") - 1, 0)
    T, U, D = bank.shape
    outs = []
    for b in range(x_feats.shape[0]):
        vectors = bank[idx[b]]
        m = (np.arange(U) < counts[idx[b]]).astype(np.float32)[:, None]
        v = vectors @ wa + ba
        scores = v @ local[b][:, None]
        scores = np.where(m > 0, scores, -1e30)
        e = np.exp(scores - scores.max(0, keepdims=True)) * m
        w = e / e.sum(0, keepdims=True)
        pooled = (w * v).sum(0)
        outs.append(np.concatenate([local[b], pooled]))
    return np.stack(outs)


if __name__ == "__main__":
    B, F, D, T, U = 2, 16, 32, 8, 4  # batch, backbone in-features, backbone_embd_size, timestamps, users

    key = jax.random.PRNGKey(0)
    k1, k2, k3, k4, k5, k6 = jax.random.split(key, 6)
    x_feats = jax.random.normal(k1, (B, F), jnp.float32)
    wb = jax.random.normal(k2, (F, D), jnp.float32) * 0.1   # synthetic backbone (Linear F->D)
    bb = jax.random.normal(k3, (1, D), jnp.float32) * 0.1
    wa = jax.random.normal(k4, (D, D), jnp.float32) * 0.1   # learnable_attention_matrix (stored as W^T)
    ba = jax.random.normal(k5, (1, D), jnp.float32) * 0.1
    bank = jax.random.normal(k6, (T, U, D), jnp.float32)    # dense self.embegings_dataset

    times = jnp.arange(T, dtype=jnp.float32) * 10.0          # sorted dataset timestamps: 0,10,...,70
    event_time_max = jnp.array([25.0, 63.0], jnp.float32)    # per-batch-element last event time

    # ragged users-per-timestamp (dense-packed from row 0)
    counts = jnp.asarray(np.array([4, 3, 4, 2, 4, 3, 4, 1], np.int32))

    out = pooling_model_forward(x_feats, event_time_max, times, bank, counts,
                                wb, bb, wa, ba)
    out = jax.block_until_ready(out)

    ref = reference_forward(x_feats, event_time_max, times, bank, counts,
                            wb, bb, wa, ba)
    np.testing.assert_allclose(np.asarray(out), ref, rtol=1e-4, atol=1e-4)
    print("KERNEL_OK")
</pallas_src>

<mosaic_0001>
module attributes {stable_mosaic.version = 11 : i64} {
  func.func @linear_kernel(%arg0: i32, %arg1: memref<8x16xf32, #tpu.memory_space<vmem>>, %arg2: memref<16x32xf32, #tpu.memory_space<vmem>>, %arg3: memref<1x32xf32, #tpu.memory_space<vmem>>, %arg4: memref<8x32xf32, #tpu.memory_space<vmem>>) attributes {dimension_semantics = [#tpu.dimension_semantics<parallel>], iteration_bounds = array<i64: 1>, scalar_prefetch = 0 : i64, scratch_operands = 0 : i64, tpu.core_type = #tpu.core_type<tc>, window_params = [{transform_indices = @transform_0, window_bounds = array<i64: 8, 16>}, {pipeline_mode = #tpu.pipeline_mode<synchronous>, transform_indices = @transform_1, window_bounds = array<i64: 16, 32>}, {pipeline_mode = #tpu.pipeline_mode<synchronous>, transform_indices = @transform_2, window_bounds = array<i64: 1, 32>}, {transform_indices = @transform_3, window_bounds = array<i64: 8, 32>}]} {
    %c0 = arith.constant 0 : index
    %c0_0 = arith.constant 0 : index
    %0 = vector.load %arg1[%c0, %c0_0] : memref<8x16xf32, #tpu.memory_space<vmem>>, vector<8x16xf32>
    %c0_1 = arith.constant 0 : index
    %c0_2 = arith.constant 0 : index
    %1 = vector.load %arg2[%c0_1, %c0_2] : memref<16x32xf32, #tpu.memory_space<vmem>>, vector<16x32xf32>
    %cst = arith.constant dense<0.000000e+00> : vector<8x32xf32>
    %2 = tpu.matmul %0, %1, %cst {dimension_numbers = #tpu.dot_dimension_numbers<[1], [0], [0], [1], [0, 0, 1, 1], [], []>} : vector<8x16xf32>, vector<16x32xf32>, vector<8x32xf32> -> vector<8x32xf32>
    %c0_3 = arith.constant 0 : index
    %c0_4 = arith.constant 0 : index
    %3 = vector.load %arg3[%c0_3, %c0_4] : memref<1x32xf32, #tpu.memory_space<vmem>>, vector<1x32xf32>
    %4 = vector.broadcast %3 : vector<1x32xf32> to vector<8x32xf32>
    %5 = arith.addf %2, %4 : vector<8x32xf32>
    %c0_5 = arith.constant 0 : index
    %c0_6 = arith.constant 0 : index
    %6 = vector.load %arg4[%c0_5, %c0_6] : memref<8x32xf32, #tpu.memory_space<vmem>>, vector<8x32xf32>
    tpu.vector_store %arg4[%c0_5, %c0_6], %5 {strides = array<i32>} : memref<8x32xf32, #tpu.memory_space<vmem>>, vector<8x32xf32>,
    return
  }
  func.func @transform_0(%arg0: i32) -> (i32, i32) {
    %c0_i32 = arith.constant 0 : i32
    %c0_i32_0 = arith.constant 0 : i32
    return %arg0, %c0_i32 : i32, i32
  }
  func.func @transform_1(%arg0: i32) -> (i32, i32) {
    %c0_i32 = arith.constant 0 : i32
    %c0_i32_0 = arith.constant 0 : i32
    %c0_i32_1 = arith.constant 0 : i32
    return %c0_i32, %c0_i32_0 : i32, i32
  }
  func.func @transform_2(%arg0: i32) -> (i32, i32) {
    %c0_i32 = arith.constant 0 : i32
    %c0_i32_0 = arith.constant 0 : i32
    %c0_i32_1 = arith.constant 0 : i32
    return %c0_i32, %c0_i32_0 : i32, i32
  }
  func.func @transform_3(%arg0: i32) -> (i32, i32) {
    %c0_i32 = arith.constant 0 : i32
    %c0_i32_0 = arith.constant 0 : i32
    return %arg0, %c0_i32 : i32, i32
  }
}

</mosaic_0001>

<llo_original>
// kernel: tpu_custom_call.1
$region0: #{tpu_custom_call.1}
  #allocation0 [shape = 'u32[]', space=smem, size = 0x4, offset = 0x4, fixed_abs, tag = 'smem constant byte address 0x4 - core index']
  #allocation1 [shape = 'u32[144,128]{1,0:T(1,128)}', space=vmem, size = 0x12000, scoped, tag = 'internal scratch']
  %s0 = inlined_call_operand.hbm [shape: f32[8,16], index: 0, kind: input, shape index: {}]
  %s1 = inlined_call_operand.hbm [shape: f32[16,32], index: 1, kind: input, shape index: {}]
  %s2 = inlined_call_operand.vmem [shape: f32[1,32], index: 2, kind: input, shape index: {}]
  %s3 = inlined_call_operand.hbm [shape: f32[8,32], index: 3, kind: output, shape index: {}]
  %s4 = sld [smem:[#allocation0]]
  $region30: #{tpu_custom_call.1} parent=0
    _
  %s6 = ssub.s32 1, %s4
  %s7 = scalar_select 0, %s6, %s4
  $region1: #{tpu_custom_call.1} parent=0
    #allocation2 [shape = 'u8[4096]{0}', space=vmem, size = 0x1000, scoped, tag = 'input window, operand 0, single buffered']
    #allocation3 [shape = 's32[1]{0}', space=sflag, size = 0x4, scoped, tag = 'scoped memory for tpu_custom_call.1']
    #allocation4 [shape = 's32[1]{0}', space=sflag, size = 0x4, scoped, tag = 'scoped memory for tpu_custom_call.1']
    #allocation5 [shape = 'u8[8192]{0}', space=vmem, size = 0x2000, scoped, tag = 'input window, operand 1, single buffered']
    #allocation6 [shape = 's32[1]{0}', space=sflag, size = 0x4, scoped, tag = 'scoped memory for tpu_custom_call.1']
    #allocation7 [shape = 'u8[4096]{0}', space=vmem, size = 0x1000, scoped, tag = 'output window, operand 0, single buffered']
    %8 = vsyncpa [#allocation3], 0
    %9 = vsyncpa [#allocation6], 0
    %10 = vsyncpa [#allocation4], 0
    // Predicated region
    $region2: #{tpu_custom_call.1} parent=1 // pred_check
      _
    $region3: #{tpu_custom_call.1} parent=1 // pred_check_branch
      %12 = sbr.rel (0) target = $region5
    $region4: #{tpu_custom_call.1} parent=1 // pred_region
      %s14 = ssub.s32 128, 128
      %15 = vsyncadd [#allocation3], %s14
      %s17 = sshll.u32 [#allocation2], 4
      %s18 = int_to_ptr.vmem [resolvable:$true] %s17
      %20 = dma.hbm_to_vmem [thread:$0]  %s0, 128, %s18, [#allocation3]
    $region5: #{tpu_custom_call.1} parent=1 // pred_fallthru
      _
    // Predicated region
    $region6: #{tpu_custom_call.1} parent=1 // pred_check
      _
    $region7: #{tpu_custom_call.1} parent=1 // pred_check_branch
      %22 = sbr.rel (0) target = $region9
    $region8: #{tpu_custom_call.1} parent=1 // pred_region
      %s24 = ssub.s32 256, 256
      %25 = vsyncadd [#allocation6], %s24
      %s26 = sshll.u32 [#allocation5], 4
      %s27 = int_to_ptr.vmem [resolvable:$true] %s26
      %32 = dma.hbm_to_vmem [thread:$0]  %s1, 256, %s27, [#allocation6], 128, 128, 8
    $region9: #{tpu_custom_call.1} parent=1 // pred_fallthru
      _
    // Predicated region
    $region10: #{tpu_custom_call.1} parent=1 // pred_check
      _
    $region11: #{tpu_custom_call.1} parent=1 // pred_check_branch
      %34 = sbr.rel (0) target = $region13
    $region12: #{tpu_custom_call.1} parent=1 // pred_region
      _
    $region13: #{tpu_custom_call.1} parent=1 // pred_fallthru
      _
    // Predicated region
    $region14: #{tpu_custom_call.1} parent=1 // pred_check
      _
    $region15: #{tpu_custom_call.1} parent=1 // pred_check_branch
      %36 = sbr.rel (0) target = $region17
    $region16: #{tpu_custom_call.1} parent=1 // pred_region
      %37 = dma.done [#allocation3], 128
    $region17: #{tpu_custom_call.1} parent=1 // pred_fallthru
      _
    // Predicated region
    $region18: #{tpu_custom_call.1} parent=1 // pred_check
      _
    $region19: #{tpu_custom_call.1} parent=1 // pred_check_branch
      %39 = sbr.rel (0) target = $region21
    $region20: #{tpu_custom_call.1} parent=1 // pred_region
      %40 = dma.done [#allocation6], 256
    $region21: #{tpu_custom_call.1} parent=1 // pred_fallthru
      _
    %v41 = vld [vmem:[#allocation2] sm:$0xff]
    %v42 = vld [vmem:[#allocation5] sm:$0xff]
    %v43 = vld [vmem:[#allocation5 + $0x8] sm:$0xff]
    %v44 = vld [vmem:[%s2] sm:$0x1]
    %v46 = vlaneseq
    %v47 = vshrl.u32 %v46, 7
    %v48 = vsub.s32 0, %v47
    %v49 = vrot.slane %v44, %v48
    %vm51 = vcmask 130048
    %v53 = vsel %vm51, %v41, 0
    %55 = vmatprep.subr.mxu0 0.0
    %56 = vmatpush1.msra.mxu0 %v42
    %57 = vmatprep.subr.mxu0 0.0
    %58 = vmatpush1.msra.mxu0 %v43
    %59 = vmatprep.subr.mxu0 0.0
    %60 = vmatpush1.msra.mxu0 0.0
    %61 = vmatprep.subr.mxu0 0.0
    %62 = vmatpush1.msra.mxu0 0.0
    %63 = vmatprep.subr.mxu0 0.0
    %64 = vmatpush1.msra.mxu0 0.0
    %65 = vmatprep.subr.mxu0 0.0
    %66 = vmatpush1.msra.mxu0 0.0
    %67 = vmatprep.subr.mxu0 0.0
    %68 = vmatpush1.msra.mxu0 0.0
    %69 = vmatprep.subr.mxu0 0.0
    %70 = vmatpush1.msra.mxu0 0.0
    %71 = vmatprep.subr.mxu0 0.0
    %72 = vmatpush1.msra.mxu0 0.0
    %73 = vmatprep.subr.mxu0 0.0
    %74 = vmatpush1.msra.mxu0 0.0
    %75 = vmatprep.subr.mxu0 0.0
    %76 = vmatpush1.msra.mxu0 0.0
    %77 = vmatprep.subr.mxu0 0.0
    %78 = vmatpush1.msra.mxu0 0.0
    %79 = vmatprep.subr.mxu0 0.0
    %80 = vmatpush1.msra.mxu0 0.0
    %81 = vmatprep.subr.mxu0 0.0
    %82 = vmatpush1.msra.mxu0 0.0
    %83 = vmatprep.subr.mxu0 0.0
    %84 = vmatpush1.msra.mxu0 0.0
    %85 = vmatprep.subr.mxu0 0.0
    %86 = vmatpush1.msra.mxu0 0.0
    %87 = vmatprep.subr.mxu0 0.0
    %88 = vmatpush1.msra.mxu0 0.0
    %89 = vmatprep.subr.mxu0 0.0
    %90 = vmatpush1.msra.mxu0 0.0
    %91 = vmatprep.subr.mxu0 0.0
    %92 = vmatpush1.msra.mxu0 0.0
    %93 = vmatprep.subr.mxu0 0.0
    %94 = vmatpush1.msra.mxu0 0.0
    %95 = vmatprep.subr.mxu0 0.0
    %96 = vmatpush1.msra.mxu0 0.0
    %97 = vmatprep.subr.mxu0 0.0
    %98 = vmatpush1.msra.mxu0 0.0
    %99 = vmatprep.subr.mxu0 0.0
    %100 = vmatpush1.msra.mxu0 0.0
    %101 = vmatprep.subr.mxu0 0.0
    %102 = vmatpush1.msra.mxu0 0.0
    %103 = vmatprep.subr.mxu0 0.0
    %104 = vmatpush1.msra.mxu0 0.0
    %105 = vmatprep.subr.mxu0 0.0
    %106 = vmatpush1.msra.mxu0 0.0
    %107 = vmatprep.subr.mxu0 0.0
    %108 = vmatpush1.msra.mxu0 0.0
    %109 = vmatprep.subr.mxu0 0.0
    %110 = vmatpush1.msra.mxu0 0.0
    %111 = vmatprep.subr.mxu0 0.0
    %112 = vmatpush1.msra.mxu0 0.0
    %113 = vmatprep.subr.mxu0 0.0
    %114 = vmatpush1.msra.mxu0 0.0
    %115 = vmatprep.subr.mxu0 0.0
    %116 = vmatpush1.msra.mxu0 0.0
    %117 = vmatprep.subr.mxu0 0.0
    %118 = vmatpush1.msra.mxu0 0.0
    %119 = vmatprep.mubr.f32.mxu0 0.0
    %120 = vmatmul.mubr.f32.gmra.mrb[0].mxu0 %v53
    %v121 = vpop.f32.mrb[0].mxu0
    %v122 = vadd.f32 %v49, %v121
    %v123 = vpop.f32.mrb[0].mxu0
    %124 = vdwg.mxu0
    %vm125 = vcmask 261120
    %126 = vst.msk [vmem:[#allocation7] sm:$0xff] %vm125, %v122
    // Predicated region
    $region22: #{tpu_custom_call.1} parent=1 // pred_check
      _
    $region23: #{tpu_custom_call.1} parent=1 // pred_check_branch
      %128 = sbr.rel (0) target = $region25
    $region24: #{tpu_custom_call.1} parent=1 // pred_region
      %s130 = ssub.s32 128, 128
      %131 = vsyncadd [#allocation4], %s130
      %s133 = sshll.u32 [#allocation7], 4
      %s134 = int_to_ptr.vmem [resolvable:$true] %s133
      %136 = dma.vmem_to_hbm [thread:$0]  %s134, 128, %s3, [#allocation4]
    $region25: #{tpu_custom_call.1} parent=1 // pred_fallthru
      _
    // Predicated region
    $region26: #{tpu_custom_call.1} parent=1 // pred_check
      _
    $region27: #{tpu_custom_call.1} parent=1 // pred_check_branch
      %138 = sbr.rel (0) target = $region29
    $region28: #{tpu_custom_call.1} parent=1 // pred_region
      %139 = dma.done [#allocation4], 128
    $region29: #{tpu_custom_call.1} parent=1 // pred_fallthru
      _
    %140 = vsyncpa [#allocation3], 1
    %141 = vsyncpa [#allocation6], 1
    %142 = vsyncpa [#allocation4], 1

</llo_original>
